<compile_context>
chip_gen: v7x
topology: tpu7x:2x2x1
jax: 0.10.0
libtpu: 0.0.40
codegen_flags: <defaults>
</compile_context>

<pallas_src>
import functools

import jax
import jax.numpy as jnp
import numpy as np
from jax.experimental import pallas as pl
from jax.experimental.pallas import tpu as pltpu


def _round_up(x, m):
    return ((x + m - 1) // m) * m


def _pad_to(x, shape):
    pads = [(0, s - d) for d, s in zip(x.shape, shape)]
    return jnp.pad(x, pads)


# ----------------------------------------------------------------------------
# Kernel 1: BERT-lite encoder (CLS rows only, weights streamed per layer)
#           + fused GRU input-gate linear on the final layer step.
# grid = (row_blocks [parallel], num_bert_layers [arbitrary])
# ----------------------------------------------------------------------------
def _bert_gate_kernel(x_ref, w_ref, b_ref, wih_ref, bih_ref, o_ref,
                      h_ref, acc_ref, *, num_layers):
    # x_ref  : (tr, Hp)  f32   CLS embeddings (resident across layer axis)
    # w_ref  : (1, Hp, Hp) bf16  layer-l weight (streamed per grid step)
    # b_ref  : (1, 1, Hp)  f32
    # wih_ref: (Hp, Gp) bf16   GRU W_ih, packed r|z|n gates (resident)
    # bih_ref: (1, Gp)  f32
    # o_ref  : (tr, Gp) f32    (mean-over-layers CLS) @ W_ih + b_ih
    # h_ref  : (tr, Hp) f32 VMEM scratch  running activation across layers
    # acc_ref: (tr, Hp) f32 VMEM scratch  running CLS sum across layers
    l = pl.program_id(1)

    @pl.when(l == 0)
    def _():
        h_ref[...] = x_ref[...]
        acc_ref[...] = jnp.zeros_like(acc_ref)

    h = jnp.tanh(
        jnp.dot(h_ref[...].astype(jnp.bfloat16), w_ref[0],
                preferred_element_type=jnp.float32) + b_ref[0])
    h_ref[...] = h
    acc_ref[...] = acc_ref[...] + h

    @pl.when(l == num_layers - 1)
    def _():
        mean = acc_ref[...] * (1.0 / num_layers)
        gates = jnp.dot(mean.astype(jnp.bfloat16), wih_ref[...],
                        preferred_element_type=jnp.float32) + bih_ref[...]
        o_ref[...] = gates.astype(o_ref.dtype)


# ----------------------------------------------------------------------------
# Kernel 2: single-layer GRU recurrence (PyTorch gate order r, z, n).
# Time is chunked over the grid; hidden state carried in VMEM scratch.
# ----------------------------------------------------------------------------
def _gru_kernel(xg_ref, whh_ref, bhh_ref, o_ref, h_ref, *, c, t_chunk):
    # xg_ref : (Tt, B_pad, Gp) f32  precomputed input gates, packed r|z|n
    # whh_ref: (c, Gp) bf16         hidden->gates weight, same packing
    # bhh_ref: (1, Gp) f32
    # o_ref  : (Tt, B_pad, Cp) f32  hidden states (lanes [c:Cp) zero)
    # h_ref  : (B_pad, c) f32 VMEM  hidden-state carry across time chunks
    @pl.when(pl.program_id(0) == 0)
    def _():
        h_ref[...] = jnp.zeros_like(h_ref)

    # Zero the output block once so padded lanes [c:Cp) never hold
    # uninitialized VMEM (downstream weight rows there are zero anyway).
    o_ref[...] = jnp.zeros_like(o_ref)

    whh = whh_ref[...]
    bhh = bhh_ref[...]
    h = h_ref[...]
    # Static unroll over the small fixed chunk: the grid axis already bounds
    # code size / vreg live ranges (equivalent to fori_loop(unroll=True)),
    # and concrete indices keep every load/store trivially lowerable.
    for t in range(t_chunk):
        ig = xg_ref[t]                                       # (B_pad, Gp)
        hg = jnp.dot(h.astype(jnp.bfloat16), whh,
                     preferred_element_type=jnp.float32) + bhh
        g = ig + hg
        r = jax.nn.sigmoid(g[:, 0:c])
        z = jax.nn.sigmoid(g[:, c:2 * c])
        n = jnp.tanh(ig[:, 2 * c:3 * c] + r * hg[:, 2 * c:3 * c])
        h = (1.0 - z) * n + z * h
        o_ref[t, :, 0:c] = h.astype(o_ref.dtype)
    h_ref[...] = h
    # TODO(synk): pack_padded_sequence freezes h past each conversation's true
    # length; here h keeps evolving on zero inputs, but only valid-prefix
    # timesteps are gathered downstream, so consumed values are identical.


# ----------------------------------------------------------------------------
# Kernel 3: fused head  out = tanh(x @ Wc2d + bc2d) @ Wd2o + bd2o  (row-tiled)
# ----------------------------------------------------------------------------
def _head_kernel(x_ref, w1_ref, b1_ref, w2_ref, b2_ref, o_ref):
    d = jnp.tanh(
        jnp.dot(x_ref[...].astype(jnp.bfloat16), w1_ref[...],
                preferred_element_type=jnp.float32) + b1_ref[...])
    y = jnp.dot(d.astype(jnp.bfloat16), w2_ref[...],
                preferred_element_type=jnp.float32) + b2_ref[...]
    o_ref[...] = y.astype(o_ref.dtype)


# ----------------------------------------------------------------------------
# One-time parameter preprocessing (padding / gate packing / bf16 casts)
# ----------------------------------------------------------------------------
def prepare_params(p, cfg):
    H = cfg["encoder_hidden_size"]
    C = cfg["context_size"]
    NL = cfg["num_layers"]
    NCLS = cfg["num_classes"]
    ctx_in = NL * H

    Hp = _round_up(H, 128)
    Gp = _round_up(3 * C, 128)
    Cp = _round_up(C, 128)
    Dp = _round_up(NL * C, 128)
    Kp = _round_up(NCLS, 128)

    q = {}
    q["embedding"] = p["embedding"]
    q["bert_w"] = jnp.stack([_pad_to(w, (Hp, Hp)) for w in p["bert_w"]]
                            ).astype(jnp.bfloat16)
    q["bert_b"] = jnp.stack([_pad_to(b.reshape(1, H), (1, Hp))
                             for b in p["bert_b"]]).astype(jnp.float32)

    # GRU weights packed: gate k in (r, z, n) occupies columns [k*C, (k+1)*C)
    # of a single Gp-wide tile (one 128-lane tile when 3C <= 128).
    w_ih = jnp.zeros((Hp, Gp), jnp.float32)
    b_ih = jnp.zeros((1, Gp), jnp.float32)
    w_hh = jnp.zeros((C, Gp), jnp.float32)
    b_hh = jnp.zeros((1, Gp), jnp.float32)
    for k in range(3):
        w_ih = w_ih.at[:ctx_in, k * C:(k + 1) * C].set(p["gru_w_ih"][k])
        b_ih = b_ih.at[:, k * C:(k + 1) * C].set(p["gru_b_ih"][k])
        w_hh = w_hh.at[:, k * C:(k + 1) * C].set(p["gru_w_hh"][k])
        b_hh = b_hh.at[:, k * C:(k + 1) * C].set(p["gru_b_hh"][k])
    q["w_ih"] = w_ih.astype(jnp.bfloat16)
    q["b_ih"] = b_ih
    q["w_hh"] = w_hh.astype(jnp.bfloat16)
    q["b_hh"] = b_hh

    q["c2d_w"] = _pad_to(p["c2d_w"], (Cp, Dp)).astype(jnp.bfloat16)
    q["c2d_b"] = _pad_to(p["c2d_b"].reshape(1, -1), (1, Dp)).astype(jnp.float32)
    q["d2o_w"] = _pad_to(p["d2o_w"], (Dp, Kp)).astype(jnp.bfloat16)
    q["d2o_b"] = _pad_to(p["d2o_b"].reshape(1, -1), (1, Kp)).astype(jnp.float32)
    return q


# ----------------------------------------------------------------------------
# bc_RNN forward
# ----------------------------------------------------------------------------
def bc_rnn_forward(prep, input_sentences, input_masks, conv_lengths, cfg):
    del input_masks  # TODO(synk): only consumed by real BERT attention (not reproduced)
    # NOTE: conv_lengths / T / gather tables are Python-baked, so each distinct
    # conversation-length pattern retraces; bucket lengths when serving.
    conv_lengths = [int(l) for l in conv_lengths]
    S, _ = input_sentences.shape
    H = cfg["encoder_hidden_size"]
    C = cfg["context_size"]
    NL = cfg["num_layers"]
    NB = cfg["num_bert_layers"]
    NCLS = cfg["num_classes"]

    Hp = _round_up(H, 128)
    Gp = _round_up(3 * C, 128)
    Cp = _round_up(C, 128)
    Dp = _round_up(NL * C, 128)
    Kp = _round_up(NCLS, 128)
    S_pad = _round_up(S, 8)
    B = len(conv_lengths)
    B_pad = _round_up(B, 8)
    T = max(conv_lengths)
    Tt = 8                              # GRU timesteps per grid step
    T_pad = _round_up(T, Tt)

    # --- stage 1: BERT-lite on CLS rows only + fused GRU gate linear --------
    cls_tok = input_sentences[:, 0]
    emb_cls = jnp.take(prep["embedding"], cls_tok, axis=0)          # (S, H)
    x_cls = _pad_to(emb_cls, (S_pad, Hp)).astype(jnp.float32)

    tile_r = min(512, S_pad)
    gates = pl.pallas_call(
        functools.partial(_bert_gate_kernel, num_layers=NB),
        out_shape=jax.ShapeDtypeStruct((S_pad, Gp), jnp.float32),
        grid=(pl.cdiv(S_pad, tile_r), NB),
        in_specs=[
            pl.BlockSpec((tile_r, Hp), lambda i, l: (i, 0)),
            pl.BlockSpec((1, Hp, Hp), lambda i, l: (l, 0, 0)),   # stream layer l
            pl.BlockSpec((1, 1, Hp), lambda i, l: (l, 0, 0)),
            pl.BlockSpec((Hp, Gp), lambda i, l: (0, 0)),         # resident
            pl.BlockSpec((1, Gp), lambda i, l: (0, 0)),
        ],
        out_specs=pl.BlockSpec((tile_r, Gp), lambda i, l: (i, 0)),
        scratch_shapes=[pltpu.VMEM((tile_r, Hp), jnp.float32),
                        pltpu.VMEM((tile_r, Hp), jnp.float32)],
        compiler_params=pltpu.CompilerParams(
            dimension_semantics=("parallel", "arbitrary")),
    )(x_cls, prep["bert_w"], prep["bert_b"], prep["w_ih"], prep["b_ih"])

    # --- pack sentence gate rows into time-major conversations (one gather) -
    starts = np.concatenate([[0], np.cumsum(conv_lengths)[:-1]]).astype(np.int32)
    pad_row = S_pad                              # index of the appended zero row
    gates_ext = jnp.concatenate([gates, jnp.zeros((1, Gp), gates.dtype)], axis=0)
    gather_idx = np.full((T_pad, B_pad), pad_row, dtype=np.int32)
    for b, (s0, ln) in enumerate(zip(starts, conv_lengths)):
        # valid steps MUST stay a time-major prefix per column (GRU relies on it)
        gather_idx[:ln, b] = np.arange(s0, s0 + ln, dtype=np.int32)
    x_gates = jnp.take(gates_ext, jnp.asarray(gather_idx.reshape(-1)), axis=0)
    x_gates = x_gates.reshape(T_pad, B_pad, Gp)

    # --- stage 2: GRU recurrence, time chunks streamed through the pipeline -
    ctx = pl.pallas_call(
        functools.partial(_gru_kernel, c=C, t_chunk=Tt),
        out_shape=jax.ShapeDtypeStruct((T_pad, B_pad, Cp), jnp.float32),
        grid=(T_pad // Tt,),
        in_specs=[
            pl.BlockSpec((Tt, B_pad, Gp), lambda t: (t, 0, 0)),
            pl.BlockSpec((C, Gp), lambda t: (0, 0)),
            pl.BlockSpec((1, Gp), lambda t: (0, 0)),
        ],
        out_specs=pl.BlockSpec((Tt, B_pad, Cp), lambda t: (t, 0, 0)),
        scratch_shapes=[pltpu.VMEM((B_pad, C), jnp.float32)],
        compiler_params=pltpu.CompilerParams(
            dimension_semantics=("arbitrary",)),
    )(x_gates, prep["w_hh"], prep["b_hh"])

    # --- unpack: keep only valid timesteps (pad_packed equivalent) ----------
    flat_ctx = ctx.reshape(T_pad * B_pad, Cp)
    unpack_idx = np.concatenate(
        [np.arange(ln, dtype=np.int32) * B_pad + b
         for b, ln in enumerate(conv_lengths)])                  # (S,)
    context_outputs = jnp.take(flat_ctx, jnp.asarray(unpack_idx), axis=0)
    context_outputs = _pad_to(context_outputs, (S_pad, Cp))

    # dropout -> identity at inference

    # --- stage 3: fused context2decoder (Linear+Tanh) + decoder2output ------
    tile_h = min(512, S_pad)
    out_pad = pl.pallas_call(
        _head_kernel,
        out_shape=jax.ShapeDtypeStruct((S_pad, Kp), jnp.float32),
        grid=(pl.cdiv(S_pad, tile_h),),
        in_specs=[
            pl.BlockSpec((tile_h, Cp), lambda i: (i, 0)),
            pl.BlockSpec((Cp, Dp), lambda i: (0, 0)),
            pl.BlockSpec((1, Dp), lambda i: (0, 0)),
            pl.BlockSpec((Dp, Kp), lambda i: (0, 0)),
            pl.BlockSpec((1, Kp), lambda i: (0, 0)),
        ],
        out_specs=pl.BlockSpec((tile_h, Kp), lambda i: (i, 0)),
        compiler_params=pltpu.CompilerParams(
            dimension_semantics=("parallel",)),
    )(context_outputs, prep["c2d_w"], prep["c2d_b"], prep["d2o_w"], prep["d2o_b"])

    return out_pad[:S, :NCLS]                                    # (S, num_classes)


# ----------------------------------------------------------------------------
# deterministic parameter construction (natural, torch-like shapes)
# ----------------------------------------------------------------------------
def make_params(key, cfg):
    H = cfg["encoder_hidden_size"]
    C = cfg["context_size"]
    NL = cfg["num_layers"]
    ks = jax.random.split(key, 16)
    p = {}
    p["embedding"] = 0.1 * jax.random.normal(ks[0], (cfg["vocab_size"], H), jnp.float32)
    p["bert_w"] = [0.1 * jax.random.normal(ks[1 + l], (H, H), jnp.float32)
                   for l in range(cfg["num_bert_layers"])]
    p["bert_b"] = [0.01 * jax.random.normal(ks[4 + l], (H,), jnp.float32)
                   for l in range(cfg["num_bert_layers"])]
    ctx_in = NL * H
    p["gru_w_ih"] = 0.1 * jax.random.normal(ks[7], (3, ctx_in, C), jnp.float32)
    p["gru_w_hh"] = 0.1 * jax.random.normal(ks[8], (3, C, C), jnp.float32)
    p["gru_b_ih"] = 0.01 * jax.random.normal(ks[9], (3, 1, C), jnp.float32)
    p["gru_b_hh"] = 0.01 * jax.random.normal(ks[10], (3, 1, C), jnp.float32)
    p["c2d_w"] = 0.1 * jax.random.normal(ks[11], (C, NL * C), jnp.float32)
    p["c2d_b"] = 0.01 * jax.random.normal(ks[12], (NL * C,), jnp.float32)
    p["d2o_w"] = 0.1 * jax.random.normal(ks[13], (NL * C, cfg["num_classes"]), jnp.float32)
    p["d2o_b"] = 0.01 * jax.random.normal(ks[14], (cfg["num_classes"],), jnp.float32)
    return p


if __name__ == "__main__":
    cfg = dict(
        vocab_size=50,
        seq_len=8,
        encoder_hidden_size=32,
        num_bert_layers=2,
        num_layers=1,
        context_size=32,
        num_classes=4,
    )
    conv_lengths = [3, 5]                 # two conversations, 8 sentences total
    num_sentences = sum(conv_lengths)

    key = jax.random.PRNGKey(0)
    k_tok, k_par = jax.random.split(key)

    input_sentences = jax.random.randint(
        k_tok, (num_sentences, cfg["seq_len"]), 0, cfg["vocab_size"], jnp.int32)
    input_masks = jnp.ones((num_sentences, cfg["seq_len"]), jnp.int32)

    params = make_params(k_par, cfg)
    prep = prepare_params(params, cfg)    # one-time pad/pack/bf16 (hoisted)

    out = bc_rnn_forward(prep, input_sentences, input_masks, conv_lengths, cfg)
    out = jax.block_until_ready(out)
    assert out.shape == (num_sentences, cfg["num_classes"])
    assert bool(jnp.all(jnp.isfinite(out)))
    print("KERNEL_OK")
</pallas_src>

<mosaic_0001>
module attributes {stable_mosaic.version = 11 : i64} {
  func.func @_bert_gate_kernel(%arg0: i32, %arg1: i32, %arg2: memref<8x128xf32, #tpu.memory_space<vmem>>, %arg3: memref<1x128x128xbf16, #tpu.memory_space<vmem>>, %arg4: memref<1x1x128xf32, #tpu.memory_space<vmem>>, %arg5: memref<128x128xbf16, #tpu.memory_space<vmem>>, %arg6: memref<1x128xf32, #tpu.memory_space<vmem>>, %arg7: memref<8x128xf32, #tpu.memory_space<vmem>>, %arg8: memref<8x128xf32, #tpu.memory_space<vmem>>, %arg9: memref<8x128xf32, #tpu.memory_space<vmem>>) attributes {dimension_semantics = [#tpu.dimension_semantics<parallel>, #tpu.dimension_semantics<arbitrary>], iteration_bounds = array<i64: 1, 2>, scalar_prefetch = 0 : i64, scratch_operands = 2 : i64, tpu.core_type = #tpu.core_type<tc>, window_params = [{transform_indices = @transform_0, window_bounds = array<i64: 8, 128>}, {transform_indices = @transform_1, window_bounds = array<i64: 1, 128, 128>}, {transform_indices = @transform_2, window_bounds = array<i64: 1, 1, 128>}, {pipeline_mode = #tpu.pipeline_mode<synchronous>, transform_indices = @transform_3, window_bounds = array<i64: 128, 128>}, {pipeline_mode = #tpu.pipeline_mode<synchronous>, transform_indices = @transform_4, window_bounds = array<i64: 1, 128>}, {transform_indices = @transform_5, window_bounds = array<i64: 8, 128>}]} {
    %c0_i32 = arith.constant 0 : i32
    %0 = arith.cmpi eq, %arg1, %c0_i32 : i32
    %1 = arith.extui %0 : i1 to i32
    %c0_i32_0 = arith.constant 0 : i32
    %2 = arith.cmpi ne, %1, %c0_i32_0 : i32
    scf.if %2 {
      %c0_15 = arith.constant 0 : index
      %c0_16 = arith.constant 0 : index
      %20 = vector.load %arg2[%c0_15, %c0_16] : memref<8x128xf32, #tpu.memory_space<vmem>>, vector<8x128xf32>
      %c0_17 = arith.constant 0 : index
      %c0_18 = arith.constant 0 : index
      %21 = vector.load %arg8[%c0_17, %c0_18] : memref<8x128xf32, #tpu.memory_space<vmem>>, vector<8x128xf32>
      tpu.vector_store %arg8[%c0_17, %c0_18], %20 {strides = array<i32>} : memref<8x128xf32, #tpu.memory_space<vmem>>, vector<8x128xf32>,
      %cst_19 = arith.constant 0.000000e+00 : f32
      %22 = vector.broadcast %cst_19 : f32 to vector<8x128xf32>
      %c0_20 = arith.constant 0 : index
      %c0_21 = arith.constant 0 : index
      %23 = vector.load %arg9[%c0_20, %c0_21] : memref<8x128xf32, #tpu.memory_space<vmem>>, vector<8x128xf32>
      tpu.vector_store %arg9[%c0_20, %c0_21], %22 {strides = array<i32>} : memref<8x128xf32, #tpu.memory_space<vmem>>, vector<8x128xf32>,
    } else {
    }
    %c0 = arith.constant 0 : index
    %c0_1 = arith.constant 0 : index
    %3 = vector.load %arg8[%c0, %c0_1] : memref<8x128xf32, #tpu.memory_space<vmem>>, vector<8x128xf32>
    %4 = arith.truncf %3 : vector<8x128xf32> to vector<8x128xbf16>
    %c0_2 = arith.constant 0 : index
    %c0_3 = arith.constant 0 : index
    %c0_4 = arith.constant 0 : index
    %5 = vector.load %arg3[%c0_2, %c0_3, %c0_4] : memref<1x128x128xbf16, #tpu.memory_space<vmem>>, vector<1x128x128xbf16>
    %6 = vector.shape_cast %5 : vector<1x128x128xbf16> to vector<128x128xbf16>
    %cst = arith.constant dense<0.000000e+00> : vector<8x128xf32>
    %7 = tpu.matmul %4, %6, %cst {dimension_numbers = #tpu.dot_dimension_numbers<[1], [0], [0], [1], [0, 0, 1, 1], [], []>} : vector<8x128xbf16>, vector<128x128xbf16>, vector<8x128xf32> -> vector<8x128xf32>
    %c0_5 = arith.constant 0 : index
    %c0_6 = arith.constant 0 : index
    %c0_7 = arith.constant 0 : index
    %8 = vector.load %arg4[%c0_5, %c0_6, %c0_7] : memref<1x1x128xf32, #tpu.memory_space<vmem>>, vector<1x1x128xf32>
    %9 = vector.shape_cast %8 : vector<1x1x128xf32> to vector<1x128xf32>
    %10 = vector.broadcast %9 : vector<1x128xf32> to vector<8x128xf32>
    %11 = arith.addf %7, %10 : vector<8x128xf32>
    %12 = math.tanh %11 : vector<8x128xf32>
    %c0_8 = arith.constant 0 : index
    %c0_9 = arith.constant 0 : index
    %13 = vector.load %arg8[%c0_8, %c0_9] : memref<8x128xf32, #tpu.memory_space<vmem>>, vector<8x128xf32>
    tpu.vector_store %arg8[%c0_8, %c0_9], %12 {strides = array<i32>} : memref<8x128xf32, #tpu.memory_space<vmem>>, vector<8x128xf32>,
    %c0_10 = arith.constant 0 : index
    %c0_11 = arith.constant 0 : index
    %14 = vector.load %arg9[%c0_10, %c0_11] : memref<8x128xf32, #tpu.memory_space<vmem>>, vector<8x128xf32>
    %15 = arith.addf %14, %12 : vector<8x128xf32>
    %c0_12 = arith.constant 0 : index
    %c0_13 = arith.constant 0 : index
    %16 = vector.load %arg9[%c0_12, %c0_13] : memref<8x128xf32, #tpu.memory_space<vmem>>, vector<8x128xf32>
    tpu.vector_store %arg9[%c0_12, %c0_13], %15 {strides = array<i32>} : memref<8x128xf32, #tpu.memory_space<vmem>>, vector<8x128xf32>,
    %c1_i32 = arith.constant 1 : i32
    %17 = arith.cmpi eq, %arg1, %c1_i32 : i32
    %18 = arith.extui %17 : i1 to i32
    %c0_i32_14 = arith.constant 0 : i32
    %19 = arith.cmpi ne, %18, %c0_i32_14 : i32
    scf.if %19 {
      %c0_15 = arith.constant 0 : index
      %c0_16 = arith.constant 0 : index
      %20 = vector.load %arg9[%c0_15, %c0_16] : memref<8x128xf32, #tpu.memory_space<vmem>>, vector<8x128xf32>
      %cst_17 = arith.constant 5.000000e-01 : f32
      %21 = vector.broadcast %cst_17 : f32 to vector<8x128xf32>
      %22 = arith.mulf %20, %21 : vector<8x128xf32>
      %23 = arith.truncf %22 : vector<8x128xf32> to vector<8x128xbf16>
      %c0_18 = arith.constant 0 : index
      %c0_19 = arith.constant 0 : index
      %24 = vector.load %arg5[%c0_18, %c0_19] : memref<128x128xbf16, #tpu.memory_space<vmem>>, vector<128x128xbf16>
      %cst_20 = arith.constant dense<0.000000e+00> : vector<8x128xf32>
      %25 = tpu.matmul %23, %24, %cst_20 {dimension_numbers = #tpu.dot_dimension_numbers<[1], [0], [0], [1], [0, 0, 1, 1], [], []>} : vector<8x128xbf16>, vector<128x128xbf16>, vector<8x128xf32> -> vector<8x128xf32>
      %c0_21 = arith.constant 0 : index
      %c0_22 = arith.constant 0 : index
      %26 = vector.load %arg6[%c0_21, %c0_22] : memref<1x128xf32, #tpu.memory_space<vmem>>, vector<1x128xf32>
      %27 = vector.broadcast %26 : vector<1x128xf32> to vector<8x128xf32>
      %28 = arith.addf %25, %27 : vector<8x128xf32>
      %c0_23 = arith.constant 0 : index
      %c0_24 = arith.constant 0 : index
      %29 = vector.load %arg7[%c0_23, %c0_24] : memref<8x128xf32, #tpu.memory_space<vmem>>, vector<8x128xf32>
      tpu.vector_store %arg7[%c0_23, %c0_24], %28 {strides = array<i32>} : memref<8x128xf32, #tpu.memory_space<vmem>>, vector<8x128xf32>,
    } else {
    }
    return
  }
  func.func @transform_0(%arg0: i32, %arg1: i32) -> (i32, i32) {
    %c0_i32 = arith.constant 0 : i32
    %c0_i32_0 = arith.constant 0 : i32
    return %arg0, %c0_i32 : i32, i32
  }
  func.func @transform_1(%arg0: i32, %arg1: i32) -> (i32, i32, i32) {
    %c0_i32 = arith.constant 0 : i32
    %c0_i32_0 = arith.constant 0 : i32
    %c0_i32_1 = arith.constant 0 : i32
    return %arg1, %c0_i32, %c0_i32_0 : i32, i32, i32
  }
  func.func @transform_2(%arg0: i32, %arg1: i32) -> (i32, i32, i32) {
    %c0_i32 = arith.constant 0 : i32
    %c0_i32_0 = arith.constant 0 : i32
    %c0_i32_1 = arith.constant 0 : i32
    return %arg1, %c0_i32, %c0_i32_0 : i32, i32, i32
  }
  func.func @transform_3(%arg0: i32, %arg1: i32) -> (i32, i32) {
    %c0_i32 = arith.constant 0 : i32
    %c0_i32_0 = arith.constant 0 : i32
    %c0_i32_1 = arith.constant 0 : i32
    return %c0_i32, %c0_i32_0 : i32, i32
  }
  func.func @transform_4(%arg0: i32, %arg1: i32) -> (i32, i32) {
    %c0_i32 = arith.constant 0 : i32
    %c0_i32_0 = arith.constant 0 : i32
    %c0_i32_1 = arith.constant 0 : i32
    return %c0_i32, %c0_i32_0 : i32, i32
  }
  func.func @transform_5(%arg0: i32, %arg1: i32) -> (i32, i32) {
    %c0_i32 = arith.constant 0 : i32
    %c0_i32_0 = arith.constant 0 : i32
    return %arg0, %c0_i32 : i32, i32
  }
}

</mosaic_0001>

<llo_original>
// kernel: tpu_custom_call.1
$region0: #{tpu_custom_call.1}
  #allocation0 [shape = 'u32[]', space=smem, size = 0x4, offset = 0x4, fixed_abs, tag = 'smem constant byte address 0x4 - core index']
  #allocation1 [shape = 'u32[144,128]{1,0:T(1,128)}', space=vmem, size = 0x12000, scoped, tag = 'internal scratch']
  #allocation2 [shape = 'f32[8,128]{1,0:T(8,128)}', space=vmem, size = 0x1000, scoped, tag = 'scratch operand']
  #allocation3 [shape = 'f32[8,128]{1,0:T(8,128)}', space=vmem, size = 0x1000, scoped, tag = 'scratch operand']
  %s0 = inlined_call_operand.hbm [shape: f32[8,128], index: 0, kind: input, shape index: {}]
  %s1 = inlined_call_operand.hbm [shape: bf16[2,128,128], index: 1, kind: input, shape index: {}]
  %s2 = inlined_call_operand.vmem [shape: f32[2,1,128], index: 2, kind: input, shape index: {}]
  %s3 = inlined_call_operand.hbm [shape: bf16[128,128], index: 3, kind: input, shape index: {}]
  %s4 = inlined_call_operand.vmem [shape: f32[1,128], index: 4, kind: input, shape index: {}]
  %s5 = inlined_call_operand.hbm [shape: f32[8,128], index: 5, kind: output, shape index: {}]
  %s6 = sld [smem:[#allocation0]]
  $region73: #{tpu_custom_call.1} parent=0
    _
  %s8 = ssub.s32 1, %s6
  %s9 = scalar_select 0, %s8, %s6
  $region1: #{tpu_custom_call.1} parent=0
    #allocation4 [shape = 'u8[4096]{0}', space=vmem, size = 0x1000, scoped, tag = 'input window, operand 0, single buffered']
    #allocation5 [shape = 's32[2]{0}', space=sflag, size = 0x8, scoped, tag = 'scoped memory for tpu_custom_call.1']
    #allocation6 [shape = 's32[2]{0}', space=sflag, size = 0x8, scoped, tag = 'scoped memory for tpu_custom_call.1']
    #allocation7 [shape = 'u8[65536]{0}', space=vmem, size = 0x10000, scoped, tag = 'input window, operand 1']
    #allocation8 [shape = 's32[2]{0}', space=sflag, size = 0x8, scoped, tag = 'scoped memory for tpu_custom_call.1']
    #allocation9 [shape = 'u8[32768]{0}', space=vmem, size = 0x8000, scoped, tag = 'input window, operand 3, single buffered']
    #allocation10 [shape = 'u8[4096]{0}', space=vmem, size = 0x1000, scoped, tag = 'output window, operand 0, single buffered']
    %10 = vsyncpa [#allocation5], 0
    %11 = vsyncpa [#allocation8], 0
    %s12 = scalar_lea.sflag [#allocation8], 1
    %13 = vsyncpa %s12, 0
    %14 = vsyncpa [#allocation6], 0
    loop: start=0, step=1, limit=4
    $region2: #{tpu_custom_call.1} parent=1 // loop_pre_header
      _
    $region3: #{tpu_custom_call.1} parent=1 // loop_header
      %s16 = sphi 0, %s20
      %p17 = scmp.ge.s32.totalorder %s16, 4
      %s23 = sphi 0, %s35
      %s24 = sphi 0, %s31
      %s25 = sphi 0, %s23
      %s26 = sphi 0, %s24
      %s27 = sphi 0, %s25
      %s28 = sphi 0, %s26
      %s38 = sphi 0, %s40
      %s41 = sphi 0, %s38
      %s42 = sphi 0, %s41
      %s58 = sphi 0, %s42
      %s64 = sphi 0, %s66
      %s67 = sphi 0, %s64
      %s68 = sphi 0, %s67
      %s84 = sphi 0, %s68
      %s90 = sphi 0, %s92
      %s93 = sphi 0, %s90
      %s94 = sphi 0, %s93
      %s110 = sphi 0, %s94
      %s114 = sphi 0, %s114
      %s116 = sphi 0, %s114
      %s117 = sphi 0, %s116
      %s131 = sphi 0, %s117
      %s135 = sphi 0, %s135
      %s137 = sphi 0, %s135
      %s138 = sphi 0, %s137
      %s152 = sphi 0, %s138
      %s158 = sphi 0, %s160
      %s161 = sphi 0, %s158
      %s162 = sphi 0, %s161
      %s178 = sphi 0, %s162
    $region4: #{tpu_custom_call.1} parent=1 // loop_header_branch
      %19 = sbr.rel (%p17) target = $region8
    $region5: #{tpu_custom_call.1} parent=1 // loop_body
      %s21 = ssub.s32 %s16, 1
      %s22 = ssub.s32 %s16, 2
      %s29 = sadd.s32 1, %s24
      %p30 = scmp.ge.s32.totalorder %s29, 2
      %s31 = scalar_select %p30, 0, %s29
      %s32 = sadd.s32 1, %s23
      %s33 = scalar_select %p30, %s32, %s23
      %p34 = scmp.ge.s32.totalorder %s33, 1
      %s35 = scalar_select %p34, 0, %s33
      %s36 = ssub.s32 %s23, %s35
      %p37 = scmp.eq.s32.totalorder %s36, 0
      %s39 = sadd.s32 %s38, 1
      %s40 = scalar_select %p37, %s38, %s39
      %p43 = pneg %p37
      %p44 = scmp.eq.s32.totalorder %s16, 1
      %p45 = por %p43, %p44
      %p46 = scmp.ne.s32.totalorder %s38, %s41
      %p47 = scmp.eq.s32.totalorder %s16, 0
      %p48 = por %p46, %p47
      %p49 = scmp.ne.s32.totalorder %s38, %s41
      %p50 = scmp.eq.s32.totalorder %s21, 1
      %p51 = por %p49, %p50
      %p52 = scmp.ne.s32.totalorder %s41, %s42
      %p53 = scmp.eq.s32.totalorder %s21, 0
      %p54 = por %p52, %p53
      %p55 = scmp.ne.s32.totalorder %s41, %s42
      %p56 = scmp.eq.s32.totalorder %s22, 1
      %p57 = por %p55, %p56
      %p59 = scmp.ne.s32.totalorder %s42, %s58
      %p60 = scmp.eq.s32.totalorder %s22, 0
      %p61 = por %p59, %p60
      %s62 = ssub.s32 %s24, %s31
      %p63 = scmp.eq.s32.totalorder %s62, 0
      %s65 = sadd.s32 %s64, 1
      %s66 = scalar_select %p63, %s64, %s65
      %p69 = pneg %p63
      %p70 = scmp.eq.s32.totalorder %s16, 1
      %p71 = por %p69, %p70
      %p72 = scmp.ne.s32.totalorder %s64, %s67
      %p73 = scmp.eq.s32.totalorder %s16, 0
      %p74 = por %p72, %p73
      %p75 = scmp.ne.s32.totalorder %s64, %s67
      %p76 = scmp.eq.s32.totalorder %s21, 1
      %p77 = por %p75, %p76
      %p78 = scmp.ne.s32.totalorder %s67, %s68
      %p79 = scmp.eq.s32.totalorder %s21, 0
      %p80 = por %p78, %p79
      %p81 = scmp.ne.s32.totalorder %s67, %s68
      %p82 = scmp.eq.s32.totalorder %s22, 1
      %p83 = por %p81, %p82
      %p85 = scmp.ne.s32.totalorder %s68, %s84
      %p86 = scmp.eq.s32.totalorder %s22, 0
      %p87 = por %p85, %p86
      %s88 = ssub.s32 %s24, %s31
      %p89 = scmp.eq.s32.totalorder %s88, 0
      %s91 = sadd.s32 %s90, 1
      %s92 = scalar_select %p89, %s90, %s91
      %p95 = pneg %p89
      %p96 = scmp.eq.s32.totalorder %s16, 1
      %p97 = por %p95, %p96
      %p98 = scmp.ne.s32.totalorder %s90, %s93
      %p99 = scmp.eq.s32.totalorder %s16, 0
      %p100 = por %p98, %p99
      %p101 = scmp.ne.s32.totalorder %s90, %s93
      %p102 = scmp.eq.s32.totalorder %s21, 1
      %p103 = por %p101, %p102
      %p104 = scmp.ne.s32.totalorder %s93, %s94
      %p105 = scmp.eq.s32.totalorder %s21, 0
      %p106 = por %p104, %p105
      %p107 = scmp.ne.s32.totalorder %s93, %s94
      %p108 = scmp.eq.s32.totalorder %s22, 1
      %p109 = por %p107, %p108
      %p111 = scmp.ne.s32.totalorder %s94, %s110
      %p112 = scmp.eq.s32.totalorder %s22, 0
      %p113 = por %p111, %p112
      %s115 = sadd.s32 %s114, 1
      %p118 = scmp.eq.s32.totalorder %s16, 1
      %p119 = scmp.ne.s32.totalorder %s114, %s116
      %p120 = scmp.eq.s32.totalorder %s16, 0
      %p121 = por %p119, %p120
      %p122 = scmp.ne.s32.totalorder %s114, %s116
      %p123 = scmp.eq.s32.totalorder %s21, 1
      %p124 = por %p122, %p123
      %p125 = scmp.ne.s32.totalorder %s116, %s117
      %p126 = scmp.eq.s32.totalorder %s21, 0
      %p127 = por %p125, %p126
      %p128 = scmp.ne.s32.totalorder %s116, %s117
      %p129 = scmp.eq.s32.totalorder %s22, 1
      %p130 = por %p128, %p129
      %p132 = scmp.ne.s32.totalorder %s117, %s131
      %p133 = scmp.eq.s32.totalorder %s22, 0
      %p134 = por %p132, %p133
      %s136 = sadd.s32 %s135, 1
      %p139 = scmp.eq.s32.totalorder %s16, 1
      %p140 = scmp.ne.s32.totalorder %s135, %s137
      %p141 = scmp.eq.s32.totalorder %s16, 0
      %p142 = por %p140, %p141
      %p143 = scmp.ne.s32.totalorder %s135, %s137
      %p144 = scmp.eq.s32.totalorder %s21, 1
      %p145 = por %p143, %p144
      %p146 = scmp.ne.s32.totalorder %s137, %s138
      %p147 = scmp.eq.s32.totalorder %s21, 0
      %p148 = por %p146, %p147
      %p149 = scmp.ne.s32.totalorder %s137, %s138
      %p150 = scmp.eq.s32.totalorder %s22, 1
      %p151 = por %p149, %p150
      %p153 = scmp.ne.s32.totalorder %s138, %s152
      %p154 = scmp.eq.s32.totalorder %s22, 0
      %p155 = por %p153, %p154
      %s156 = ssub.s32 %s23, %s35
      %p157 = scmp.eq.s32.totalorder %s156, 0
      %s159 = sadd.s32 %s158, 1
      %s160 = scalar_select %p157, %s158, %s159
      %p163 = pneg %p157
      %p164 = scmp.eq.s32.totalorder %s16, 1
      %p165 = por %p163, %p164
      %p166 = scmp.ne.s32.totalorder %s158, %s161
      %p167 = scmp.eq.s32.totalorder %s16, 0
      %p168 = por %p166, %p167
      %p169 = scmp.ne.s32.totalorder %s158, %s161
      %p170 = scmp.eq.s32.totalorder %s21, 1
      %p171 = por %p169, %p170
      %p172 = scmp.ne.s32.totalorder %s161, %s162
      %p173 = scmp.eq.s32.totalorder %s21, 0
      %p174 = por %p172, %p173
      %p175 = scmp.ne.s32.totalorder %s161, %s162
      %p176 = scmp.eq.s32.totalorder %s22, 1
      %p177 = por %p175, %p176
      %p179 = scmp.ne.s32.totalorder %s162, %s178
      %p180 = scmp.eq.s32.totalorder %s22, 0
      %p181 = por %p179, %p180
      %p182 = scmp.le.s32.totalorder 1, %s16
      %p183 = scmp.lt.s32.totalorder %s16, 3
      %p184 = pnand %p182, %p183
      %p185 = pneg %p184
      // Predicated region
      $region9: #{tpu_custom_call.1} parent=5 // pred_check
        _
      $region10: #{tpu_custom_call.1} parent=5 // pred_check_branch
        %187 = sbr.rel (%p184) target = $region12
      $region11: #{tpu_custom_call.1} parent=5 // pred_region
        %s188 = ssub.s32 %s16, 1
        // Predicated region
        $region13: #{tpu_custom_call.1} parent=11 // pred_check
          %p189 = pneg %p54
        $region14: #{tpu_custom_call.1} parent=11 // pred_check_branch
          %191 = sbr.rel (%p189) target = $region16
        $region15: #{tpu_custom_call.1} parent=11 // pred_region
          %s193 = ssub.s32 128, 128
          %194 = vsyncadd [#allocation5], %s193
          %s195 = smul.addr %s25, 128
          %s196 = scalar_lea.hbm %s0, %s195
          %s198 = sshll.u32 [#allocation4], 4
          %s199 = int_to_ptr.vmem [resolvable:$true] %s198
          %201 = dma.hbm_to_vmem [thread:$0]  %s196, 128, %s199, [#allocation5]
        $region16: #{tpu_custom_call.1} parent=11 // pred_fallthru
          _
        // Predicated region
        $region17: #{tpu_custom_call.1} parent=11 // pred_check
          %p202 = pneg %p127
        $region18: #{tpu_custom_call.1} parent=11 // pred_check_branch
          %204 = sbr.rel (%p202) target = $region20
        $region19: #{tpu_custom_call.1} parent=11 // pred_region
          %s206 = ssub.s32 1024, 1024
          %207 = vsyncadd [#allocation8], %s206
          %s208 = sshll.u32 [#allocation9], 4
          %s209 = int_to_ptr.vmem [resolvable:$true] %s208
          %214 = dma.hbm_to_vmem [thread:$0]  %s3, 1024, %s209, [#allocation8], 64, 64, 4
        $region20: #{tpu_custom_call.1} parent=11 // pred_fallthru
          _
        // Predicated region
        $region21: #{tpu_custom_call.1} parent=11 // pred_check
          %p215 = pneg %p148
        $region22: #{tpu_custom_call.1} parent=11 // pred_check_branch
          %217 = sbr.rel (%p215) target = $region24
        $region23: #{tpu_custom_call.1} parent=11 // pred_region
          _
        $region24: #{tpu_custom_call.1} parent=11 // pred_fallthru
          _
      $region12: #{tpu_custom_call.1} parent=5 // pred_fallthru
        _
      %p218 = scmp.lt.s32.totalorder %s16, 2
      // Predicated region
      $region25: #{tpu_custom_call.1} parent=5 // pred_check
        %p219 = pneg %p218
      $region26: #{tpu_custom_call.1} parent=5 // pred_check_branch
        %221 = sbr.rel (%p219) target = $region28
      $region27: #{tpu_custom_call.1} parent=5 // pred_region
        // Predicated region
        $region29: #{tpu_custom_call.1} parent=27 // pred_check
          %p222 = pneg %p74
        $region30: #{tpu_custom_call.1} parent=27 // pred_check_branch
          %224 = sbr.rel (%p222) target = $region32
        $region31: #{tpu_custom_call.1} parent=27 // pred_region
          %s225 = sand.u32 %s16, 1
          %s226 = scalar_lea.sflag [#allocation8], %s225
          %s227 = sand.u32 %s64, 1
          %s228 = smul.addr %s227, 64
          %s229 = scalar_lea.vmem [#allocation7], %s228
          %s231 = ssub.s32 1024, 1024
          %232 = vsyncadd %s226, %s231
          %s233 = smul.addr %s24, 16
          %s234 = smul.addr %s233, 64
          %s235 = scalar_lea.hbm %s1, %s234
          %s236 = sshll.u32 %s229, 4
          %s237 = int_to_ptr.vmem [resolvable:$true] %s236
          %242 = dma.hbm_to_vmem [thread:$0]  %s235, 1024, %s237, %s226, 64, 64, 4
        $region32: #{tpu_custom_call.1} parent=27 // pred_fallthru
          _
        // Predicated region
        $region33: #{tpu_custom_call.1} parent=27 // pred_check
          %p243 = pneg %p100
        $region34: #{tpu_custom_call.1} parent=27 // pred_check_branch
          %245 = sbr.rel (%p243) target = $region36
        $region35: #{tpu_custom_call.1} parent=27 // pred_region
          %p246 = scmp.lt.s32.totalorder %s24, 1
          %s247 = scalar_select %p246, %s24, 1
          %s248 = scalar_lea.vmem %s2, %s247
        $region36: #{tpu_custom_call.1} parent=27 // pred_fallthru
          _
      $region28: #{tpu_custom_call.1} parent=5 // pred_fallthru
        _
      %p249 = scmp.le.s32.totalorder 1, %s16
      %p250 = scmp.lt.s32.totalorder %s16, 3
      %p251 = pnand %p249, %p250
      %p252 = pneg %p251
      // Predicated region
      $region37: #{tpu_custom_call.1} parent=5 // pred_check
        _
      $region38: #{tpu_custom_call.1} parent=5 // pred_check_branch
        %254 = sbr.rel (%p251) target = $region40
      $region39: #{tpu_custom_call.1} parent=5 // pred_region
        %s255 = ssub.s32 %s16, 1
        // Predicated region
        $region41: #{tpu_custom_call.1} parent=39 // pred_check
          %p256 = pneg %p54
        $region42: #{tpu_custom_call.1} parent=39 // pred_check_branch
          %258 = sbr.rel (%p256) target = $region44
        $region43: #{tpu_custom_call.1} parent=39 // pred_region
          %259 = dma.done [#allocation5], 128
        $region44: #{tpu_custom_call.1} parent=39 // pred_fallthru
          _
        %s260 = sand.u32 %s21, 1
        %s261 = scalar_lea.sflag [#allocation8], %s260
        %s262 = sand.u32 %s67, 1
        %s263 = smul.addr %s262, 64
        %s264 = scalar_lea.vmem [#allocation7], %s263
        // Predicated region
        $region45: #{tpu_custom_call.1} parent=39 // pred_check
          %p265 = pneg %p80
        $region46: #{tpu_custom_call.1} parent=39 // pred_check_branch
          %267 = sbr.rel (%p265) target = $region48
        $region47: #{tpu_custom_call.1} parent=39 // pred_region
          %268 = dma.done %s261, 1024
        $region48: #{tpu_custom_call.1} parent=39 // pred_fallthru
          _
        // Predicated region
        $region49: #{tpu_custom_call.1} parent=39 // pred_check
          %p269 = pneg %p127
        $region50: #{tpu_custom_call.1} parent=39 // pred_check_branch
          %271 = sbr.rel (%p269) target = $region52
        $region51: #{tpu_custom_call.1} parent=39 // pred_region
          %272 = dma.done [#allocation8], 1024
        $region52: #{tpu_custom_call.1} parent=39 // pred_fallthru
          _
        %p273 = pneg %p54
        %p274 = pneg %p51
        %s275 = sand.u32 %s21, 1
        %s276 = scalar_lea.sflag [#allocation8], %s275
        %s277 = sand.u32 %s67, 1
        %s278 = smul.addr %s277, 64
        %s279 = scalar_lea.vmem [#allocation7], %s278
        %p280 = pneg %p80
        %p281 = pneg %p77
        %p282 = scmp.lt.s32.totalorder %s26, 1
        %s283 = scalar_select %p282, %s26, 1
        %s284 = scalar_lea.vmem %s2, %s283
        %p285 = pneg %p106
        %p286 = pneg %p103
        %p287 = pneg %p127
        %p288 = pneg %p124
        %p289 = pneg %p148
        %p290 = pneg %p145
        %p291 = pneg %p174
        %p292 = pneg %p171
        %p293 = scmp.lt.s32.totalorder %s26, 1
        %s294 = scalar_select %p293, %s26, 1
        %s295 = scalar_lea.vmem %s2, %s294
        %p297 = scmp.eq.s32.totalorder %s26, 0
        // Predicated region
        $region53: #{tpu_custom_call.1} parent=39 // pred_check
          %p298 = pneg %p297
        $region54: #{tpu_custom_call.1} parent=39 // pred_check_branch
          %300 = sbr.rel (%p298) target = $region56
        $region55: #{tpu_custom_call.1} parent=39 // pred_region
          %v301 = vld [vmem:[#allocation4] sm:$0xff]
          %302 = vst [vmem:[#allocation2] sm:$0xff] %v301
          %303 = vst [vmem:[#allocation3] sm:$0xff] 0.0
        $region56: #{tpu_custom_call.1} parent=39 // pred_fallthru
          _
        %v304 = vld [vmem:[#allocation2] sm:$0xff]
        %v305 = vpack.c.bf16 %v304, %v304
        %v306 = vld [vmem:[%s264] sm:$0xf]
        %v307 = vld [vmem:[%s264 + $0x4] sm:$0xf]
        %v308 = vld [vmem:[%s264 + $0x8] sm:$0xf]
        %v309 = vld [vmem:[%s264 + $0xc] sm:$0xf]
        %v310 = vld [vmem:[%s264 + $0x10] sm:$0xf]
        %v311 = vld [vmem:[%s264 + $0x14] sm:$0xf]
        %v312 = vld [vmem:[%s264 + $0x18] sm:$0xf]
        %v313 = vld [vmem:[%s264 + $0x1c] sm:$0xf]
        %v314 = vld [vmem:[%s264 + $0x20] sm:$0xf]
        %v315 = vld [vmem:[%s264 + $0x24] sm:$0xf]
        %v316 = vld [vmem:[%s264 + $0x28] sm:$0xf]
        %v317 = vld [vmem:[%s264 + $0x2c] sm:$0xf]
        %v318 = vld [vmem:[%s264 + $0x30] sm:$0xf]
        %v319 = vld [vmem:[%s264 + $0x34] sm:$0xf]
        %v320 = vld [vmem:[%s264 + $0x38] sm:$0xf]
        %v321 = vld [vmem:[%s264 + $0x3c] sm:$0xf]
        %v322 = vld [vmem:[%s295] sm:$0x1]
        %v324 = vlaneseq
        %v325 = vshrl.u32 %v324, 7
        %v326 = vsub.s32 0, %v325
        %v327 = vrot.slane %v322, %v326
        %v345 = vunpack.c.l.b16 %v306
        %v346 = vunpack.c.l.b16 %v307
        %v347 = vunpack.c.l.b16 %v308
        %v348 = vunpack.c.l.b16 %v309
        %v349 = vunpack.c.l.b16 %v310
        %v350 = vunpack.c.l.b16 %v311
        %v351 = vunpack.c.l.b16 %v312
        %v352 = vunpack.c.l.b16 %v313
        %v353 = vunpack.c.l.b16 %v314
        %v354 = vunpack.c.l.b16 %v315
        %v355 = vunpack.c.l.b16 %v316
        %v356 = vunpack.c.l.b16 %v317
        %v357 = vunpack.c.l.b16 %v318
        %v358 = vunpack.c.l.b16 %v319
        %v359 = vunpack.c.l.b16 %v320
        %v360 = vunpack.c.l.b16 %v321
        %v361 = vpack.c.b16 %v346, %v345
        %v362 = vpack.c.b16 %v348, %v347
        %v363 = vpack.c.b16 %v350, %v349
        %v364 = vpack.c.b16 %v352, %v351
        %v365 = vpack.c.b16 %v354, %v353
        %v366 = vpack.c.b16 %v356, %v355
        %v367 = vpack.c.b16 %v358, %v357
        %v368 = vpack.c.b16 %v360, %v359
        %377 = vmatprep.subr.bf16.mxu0 0
        %378 = vmatpush1.bf16.msra.mxu0 %v361
        %379 = vmatprep.subr.bf16.mxu0 0
        %380 = vmatpush1.bf16.msra.mxu0 %v362
        %381 = vmatprep.subr.bf16.mxu0 0
        %382 = vmatpush1.bf16.msra.mxu0 %v363
        %383 = vmatprep.subr.bf16.mxu0 0
        %384 = vmatpush1.bf16.msra.mxu0 %v364
        %385 = vmatprep.subr.bf16.mxu0 0
        %386 = vmatpush1.bf16.msra.mxu0 %v365
        %387 = vmatprep.subr.bf16.mxu0 0
        %388 = vmatpush1.bf16.msra.mxu0 %v366
        %389 = vmatprep.subr.bf16.mxu0 0
        %390 = vmatpush1.bf16.msra.mxu0 %v367
        %391 = vmatprep.subr.bf16.mxu0 0
        %392 = vmatpush1.bf16.msra.mxu0 %v368
        %393 = vmatprep.subr.bf16.mxu0 0
        %394 = vmatpush1.bf16.msra.mxu0 0
        %395 = vmatprep.subr.bf16.mxu0 0
        %396 = vmatpush1.bf16.msra.mxu0 0
        %397 = vmatprep.subr.bf16.mxu0 0
        %398 = vmatpush1.bf16.msra.mxu0 0
        %399 = vmatprep.subr.bf16.mxu0 0
        %400 = vmatpush1.bf16.msra.mxu0 0
        %401 = vmatprep.subr.bf16.mxu0 0
        %402 = vmatpush1.bf16.msra.mxu0 0
        %403 = vmatprep.subr.bf16.mxu0 0
        %404 = vmatpush1.bf16.msra.mxu0 0
        %405 = vmatprep.subr.bf16.mxu0 0
        %406 = vmatpush1.bf16.msra.mxu0 0
        %407 = vmatprep.subr.bf16.mxu0 0
        %408 = vmatpush1.bf16.msra.mxu0 0
        %409 = vmatprep.mubr.bf16.mxu0 0
        %410 = vmatmul.mubr.bf16.gmra.mrb[0].mxu0 %v305
        %v411 = vpop.f32.mrb[0].mxu0
        %v412 = vadd.f32 %v327, %v411
        %v413 = vpop.f32.mrb[0].mxu0
        %v414 = vpop.f32.mrb[0].mxu0
        %v415 = vpop.f32.mrb[0].mxu0
        %416 = vdwg.mxu0
        %v417 = vtanh.pop %v412
        %418 = vst [vmem:[#allocation2] sm:$0xff] %v417
        %v419 = vld [vmem:[#allocation3] sm:$0xff]
        %v420 = vadd.f32 %v419, %v417
        %421 = vst [vmem:[#allocation3] sm:$0xff] %v420
        %p422 = scmp.eq.s32.totalorder %s26, 1
        // Predicated region
        $region57: #{tpu_custom_call.1} parent=39 // pred_check
          %p423 = pneg %p422
        $region58: #{tpu_custom_call.1} parent=39 // pred_check_branch
          %425 = sbr.rel (%p423) target = $region60
        $region59: #{tpu_custom_call.1} parent=39 // pred_region
          %v426 = vld [vmem:[#allocation3] sm:$0xff]
          %v427 = vmul.f32 %v426, 0.5
          %v428 = vpack.c.bf16 %v427, %v427
          %v429 = vld [vmem:[#allocation9] sm:$0xf]
          %v430 = vld [vmem:[#allocation9 + $0x4] sm:$0xf]
          %v431 = vld [vmem:[#allocation9 + $0x8] sm:$0xf]
          %v432 = vld [vmem:[#allocation9 + $0xc] sm:$0xf]
          %v433 = vld [vmem:[#allocation9 + $0x10] sm:$0xf]
          %v434 = vld [vmem:[#allocation9 + $0x14] sm:$0xf]
          %v435 = vld [vmem:[#allocation9 + $0x18] sm:$0xf]
          %v436 = vld [vmem:[#allocation9 + $0x1c] sm:$0xf]
          %v437 = vld [vmem:[#allocation9 + $0x20] sm:$0xf]
          %v438 = vld [vmem:[#allocation9 + $0x24] sm:$0xf]
          %v439 = vld [vmem:[#allocation9 + $0x28] sm:$0xf]
          %v440 = vld [vmem:[#allocation9 + $0x2c] sm:$0xf]
          %v441 = vld [vmem:[#allocation9 + $0x30] sm:$0xf]
          %v442 = vld [vmem:[#allocation9 + $0x34] sm:$0xf]
          %v443 = vld [vmem:[#allocation9 + $0x38] sm:$0xf]
          %v444 = vld [vmem:[#allocation9 + $0x3c] sm:$0xf]
          %v445 = vld [vmem:[%s4] sm:$0x1]
          %v447 = vlaneseq
          %v448 = vshrl.u32 %v447, 7
          %v449 = vsub.s32 0, %v448
          %v450 = vrot.slane %v445, %v449
          %v468 = vunpack.c.l.b16 %v429
          %v469 = vunpack.c.l.b16 %v430
          %v470 = vunpack.c.l.b16 %v431
          %v471 = vunpack.c.l.b16 %v432
          %v472 = vunpack.c.l.b16 %v433
          %v473 = vunpack.c.l.b16 %v434
          %v474 = vunpack.c.l.b16 %v435
          %v475 = vunpack.c.l.b16 %v436
          %v476 = vunpack.c.l.b16 %v437
          %v477 = vunpack.c.l.b16 %v438
          %v478 = vunpack.c.l.b16 %v439
          %v479 = vunpack.c.l.b16 %v440
          %v480 = vunpack.c.l.b16 %v441
          %v481 = vunpack.c.l.b16 %v442
          %v482 = vunpack.c.l.b16 %v443
          %v483 = vunpack.c.l.b16 %v444
          %v484 = vpack.c.b16 %v469, %v468
          %v485 = vpack.c.b16 %v471, %v470
          %v486 = vpack.c.b16 %v473, %v472
          %v487 = vpack.c.b16 %v475, %v474
          %v488 = vpack.c.b16 %v477, %v476
          %v489 = vpack.c.b16 %v479, %v478
          %v490 = vpack.c.b16 %v481, %v480
          %v491 = vpack.c.b16 %v483, %v482
          %500 = vmatprep.subr.bf16.mxu0 0
          %501 = vmatpush1.bf16.msra.mxu0 %v484
          %502 = vmatprep.subr.bf16.mxu0 0
          %503 = vmatpush1.bf16.msra.mxu0 %v485
          %504 = vmatprep.subr.bf16.mxu0 0
          %505 = vmatpush1.bf16.msra.mxu0 %v486
          %506 = vmatprep.subr.bf16.mxu0 0
          %507 = vmatpush1.bf16.msra.mxu0 %v487
          %508 = vmatprep.subr.bf16.mxu0 0
          %509 = vmatpush1.bf16.msra.mxu0 %v488
          %510 = vmatprep.subr.bf16.mxu0 0
          %511 = vmatpush1.bf16.msra.mxu0 %v489
          %512 = vmatprep.subr.bf16.mxu0 0
          %513 = vmatpush1.bf16.msra.mxu0 %v490
          %514 = vmatprep.subr.bf16.mxu0 0
          %515 = vmatpush1.bf16.msra.mxu0 %v491
          %516 = vmatprep.subr.bf16.mxu0 0
          %517 = vmatpush1.bf16.msra.mxu0 0
          %518 = vmatprep.subr.bf16.mxu0 0
          %519 = vmatpush1.bf16.msra.mxu0 0
          %520 = vmatprep.subr.bf16.mxu0 0
          %521 = vmatpush1.bf16.msra.mxu0 0
          %522 = vmatprep.subr.bf16.mxu0 0
          %523 = vmatpush1.bf16.msra.mxu0 0
          %524 = vmatprep.subr.bf16.mxu0 0
          %525 = vmatpush1.bf16.msra.mxu0 0
          %526 = vmatprep.subr.bf16.mxu0 0
          %527 = vmatpush1.bf16.msra.mxu0 0
          %528 = vmatprep.subr.bf16.mxu0 0
          %529 = vmatpush1.bf16.msra.mxu0 0
          %530 = vmatprep.subr.bf16.mxu0 0
          %531 = vmatpush1.bf16.msra.mxu0 0
          %532 = vmatprep.mubr.bf16.mxu0 0
          %533 = vmatmul.mubr.bf16.gmra.mrb[0].mxu0 %v428
          %v534 = vpop.f32.mrb[0].mxu0
          %v535 = vadd.f32 %v450, %v534
          %v536 = vpop.f32.mrb[0].mxu0
          %v537 = vpop.f32.mrb[0].mxu0
          %v538 = vpop.f32.mrb[0].mxu0
          %539 = vdwg.mxu0
          %540 = vst [vmem:[#allocation10] sm:$0xff] %v535
        $region60: #{tpu_custom_call.1} parent=39 // pred_fallthru
          _
        // Predicated region
        $region61: #{tpu_custom_call.1} parent=39 // pred_check
          %p541 = pneg %p171
        $region62: #{tpu_custom_call.1} parent=39 // pred_check_branch
          %543 = sbr.rel (%p541) target = $region64
        $region63: #{tpu_custom_call.1} parent=39 // pred_region
          %s545 = ssub.s32 128, 128
          %546 = vsyncadd [#allocation6], %s545
          %s547 = smul.addr %s25, 128
          %s548 = scalar_lea.hbm %s5, %s547
          %s550 = sshll.u32 [#allocation10], 4
          %s551 = int_to_ptr.vmem [resolvable:$true] %s550
          %553 = dma.vmem_to_hbm [thread:$0]  %s551, 128, %s548, [#allocation6]
        $region64: #{tpu_custom_call.1} parent=39 // pred_fallthru
          _
        // Predicated region
        $region65: #{tpu_custom_call.1} parent=39 // pred_check
          %p554 = pneg %p171
        $region66: #{tpu_custom_call.1} parent=39 // pred_check_branch
          %556 = sbr.rel (%p554) target = $region68
        $region67: #{tpu_custom_call.1} parent=39 // pred_region
          %557 = dma.done [#allocation6], 128
        $region68: #{tpu_custom_call.1} parent=39 // pred_fallthru
          _
      $region40: #{tpu_custom_call.1} parent=5 // pred_fallthru
        _
      %p558 = scmp.le.s32.totalorder 2, %s16
      // Predicated region
      $region69: #{tpu_custom_call.1} parent=5 // pred_check
        %p559 = pneg %p558
      $region70: #{tpu_custom_call.1} parent=5 // pred_check_branch
        %561 = sbr.rel (%p559) target = $region72
      $region71: #{tpu_custom_call.1} parent=5 // pred_region
        %s562 = ssub.s32 %s16, 2
      $region72: #{tpu_custom_call.1} parent=5 // pred_fallthru
        _
    $region6: #{tpu_custom_call.1} parent=1 // loop_footer
      %s20 = sadd.s32 1, %s16
    $region7: #{tpu_custom_call.1} parent=1 // loop_footer_branch
      %15 = sbr.rel target = $region3
    $region8: #{tpu_custom_call.1} parent=1 // loop_exit
      _
    %563 = vsyncpa [#allocation5], 1
    %s564 = scalar_lea.sflag [#allocation5], 1
    %565 = vsyncpa %s564, 1
    %566 = vsyncpa [#allocation8], 1
    %s567 = scalar_lea.sflag [#allocation8], 1
    %568 = vsyncpa %s567, 1
    %569 = vsyncpa [#allocation6], 1
    %s570 = scalar_lea.sflag [#allocation6], 1
    %571 = vsyncpa %s570, 1

</llo_original>
